<compile_context>
chip_gen: v5e
topology: v5e:2x2
jax: 0.10.0
libtpu: 0.0.40
codegen_flags: <defaults>
</compile_context>

<pallas_src>
import functools

import jax
import jax.numpy as jnp
import numpy as np
from jax.experimental import pallas as pl
from jax.experimental.pallas import tpu as pltpu

_LANES = 128     # TPU lane width; n_sent / outputs are padded to this.
_SUBLANES = 8    # f32 sublane tile; per-batch row blocks are padded to this.


def _round_up(x, m):
    return (x + m - 1) // m * m


def _hierent_kernel(x_ref, w_ref, misc_ref, edge_t_ref, *out_refs,
                    batch, n_ents_pad, tgt_pad, hidden, n_sent, max_para,
                    compute_attn_para):
    """Everything-resident (ungridded) kernel: fused projection + per-batch attention/top-k."""
    topk_ref = out_refs[0]
    ap_ref = out_refs[1] if compute_attn_para else None

    two_h = 2 * hidden
    n_ent_rows = batch * n_ents_pad

    misc = misc_ref[...]                                   # (1+B, W) f32, tiny

    # ---- One fused projection matmul for the whole batch (key & query). ----
    # x = [ent rows ; input rows]; w = [W_ent^T | W_in^T] (zero-padded lanes);
    # misc row 0 = [b_ent | b_in | 0...].  Cross blocks are garbage, never read.
    proj = jnp.dot(x_ref[...], w_ref[...],
                   preferred_element_type=jnp.float32) + misc[0:1, :]
    key_all = proj[:n_ent_rows, 0:hidden]                  # (B*E_pad, H) f32
    query_all = proj[n_ent_rows:, hidden:two_h]            # (B*T_pad, H) f32

    lanes = topk_ref.shape[-1]                              # 128
    lane = jax.lax.broadcasted_iota(jnp.int32, (tgt_pad, lanes), 1)
    hi_mask = jnp.int32(~0xFF)
    lo_full = jnp.int32(0xFF)
    int_min = jnp.int32(-(2 ** 31))

    # ---- Per-batch attention + top-k.  B and max_para are small & static, so
    # the loops stay fully unrolled: the serially dependent XLU reduce chains of
    # independent batches interleave in the scheduler.
    for b in range(batch):
        q_b = query_all[b * tgt_pad:(b + 1) * tgt_pad, :].astype(jnp.bfloat16)
        k_b = key_all[b * n_ents_pad:(b + 1) * n_ents_pad, :].astype(jnp.bfloat16)

        # scores = query @ key^T (f32 accumulation) + additive mask bias.
        scores = jax.lax.dot_general(q_b, k_b, (((1,), (1,)), ((), ())),
                                     preferred_element_type=jnp.float32)
        scores = scores + misc[1 + b:2 + b, 0:n_ents_pad]

        # Un-normalized softmax numerator (f32 math).  Rows where every real
        # entity is masked collapse to uniform weights, same as PyTorch
        # masked_fill + softmax.
        m = jnp.max(scores, axis=-1, keepdims=True)
        e = jnp.exp(scores - m)

        # attn_para (up to a positive per-row scale) = e @ edge^T ; edge is
        # pre-transposed and zero-padded to 128 lanes -> dense MXU tile.
        ap = jnp.dot(e.astype(jnp.bfloat16), edge_t_ref[b],
                     preferred_element_type=jnp.float32)            # (T_pad, 128)

        if compute_attn_para:
            # Normalize only when attn_para is actually requested; top-k does
            # not need it.  approx reciprocal => rows sum to 1 +/- ~2^-13.
            inv_l = pl.reciprocal(jnp.sum(e, axis=-1, keepdims=True), approx=True)
            ap_ref[b] = ap * inv_l                                   # dense 128-lane store
        # TODO(synk): nn.Dropout(0.1) on the attention weights is identity at eval;
        #             training-mode dropout is not modeled.

        # ---- top-`max_para` indices (descending), one XLU reduce per pick. ----
        bits = pltpu.bitcast(ap, jnp.int32)
        # Order-preserving int32 key for any sign (ap >= 0 here since attn >= 0
        # and edge is binary, but keep it robust to negative values).
        sortable = bits ^ ((bits >> 31) & jnp.int32(0x7FFFFFFF))
        # Low 8 bits (far below bf16 operand noise) are replaced by the
        # complemented lane index, so one cross-lane max yields value + argmax,
        # with near-ties broken toward the smaller sentence index (may differ
        # from torch.argsort on exact ties).
        packed = (sortable & hi_mask) | (lo_full - lane)
        packed = jnp.where(lane < n_sent, packed, int_min)   # exclude padded sentences
        slab = jnp.zeros((tgt_pad, lanes), jnp.int32)
        for k_i in range(max_para):                           # static, unrolled
            mx = jnp.max(packed, axis=-1, keepdims=True)      # single XLU reduce
            idx = lo_full - (mx & lo_full)
            slab = jnp.where(lane == k_i, idx, slab)
            packed = jnp.where(lane == idx, int_min, packed)
        # TODO(synk): at production B*tgt_len pack 4 indices per int32 lane (or emit
        #             int8) to shrink the top-k writeback; noise at these sizes.
        topk_ref[b] = slab                                    # dense 128-lane store


@functools.partial(jax.jit, static_argnames=("max_para", "compute_attn_para"))
def hierent_topk(ent, ent_mask, edge, inputs, w_ent, b_ent, w_in, b_in,
                 max_para, compute_attn_para=False):
    """Returns (topk_idx [B,T,K] int32, attn_para [B,T,S] f32 or None)."""
    B, n_ents, H = ent.shape
    tgt_len = inputs.shape[1]
    n_sent = edge.shape[1]
    if max_para > n_sent:
        raise ValueError("max_para must be <= n_sent")
    if n_sent > _LANES:
        raise ValueError("n_sent > 128 would need a tiled top-k; not implemented")

    e_pad = _round_up(n_ents, _SUBLANES)
    t_pad = _round_up(tgt_len, _SUBLANES)
    w_lanes = max(_LANES, _round_up(2 * H, _LANES), _round_up(e_pad, _LANES))

    # Operand 1: projection input, batch folded into rows, [ent ; inputs],
    # per-batch row blocks padded to multiples of 8 so later slices are aligned.
    ent_p = jnp.pad(ent, ((0, 0), (0, e_pad - n_ents), (0, 0)))
    inp_p = jnp.pad(inputs, ((0, 0), (0, t_pad - tgt_len), (0, 0)))
    x = jnp.concatenate([ent_p.reshape(B * e_pad, H),
                         inp_p.reshape(B * t_pad, H)], axis=0).astype(jnp.bfloat16)

    # Operand 2: fused projection weight [W_ent^T | W_in^T], lane padded.
    w_fused = jnp.concatenate([w_ent.T, w_in.T], axis=1)
    w_fused = jnp.pad(w_fused, ((0, 0), (0, w_lanes - 2 * H))).astype(jnp.bfloat16)

    # Operand 3: one small f32 slab with the remaining loop-invariants:
    #   row 0     : fused bias [b_ent | b_in | 0...]
    #   rows 1..B : additive attention-mask bias (-1e18 masked, -1e30 pad entity).
    bias_row = jnp.concatenate(
        [b_ent.astype(jnp.float32), b_in.astype(jnp.float32),
         jnp.zeros((w_lanes - 2 * H,), jnp.float32)]).reshape(1, w_lanes)
    mask_bias = jnp.where(ent_mask.astype(jnp.float32) > 0.5,
                          jnp.float32(-1e18), jnp.float32(0.0))          # (B, E)
    mask_bias = jnp.pad(mask_bias, ((0, 0), (0, e_pad - n_ents)),
                        constant_values=-1e30)
    mask_bias = jnp.pad(mask_bias, ((0, 0), (0, w_lanes - e_pad)))
    misc = jnp.concatenate([bias_row, mask_bias], axis=0)                # (1+B, w_lanes)

    # Operand 4: edge pre-transposed & padded -> (B, E_pad, 128) bf16.
    edge_t = jnp.swapaxes(edge, 1, 2).astype(jnp.bfloat16)
    edge_t = jnp.pad(edge_t, ((0, 0), (0, e_pad - n_ents), (0, _LANES - n_sent)))

    out_shape = [jax.ShapeDtypeStruct((B, t_pad, _LANES), jnp.int32)]
    if compute_attn_para:
        out_shape.append(jax.ShapeDtypeStruct((B, t_pad, _LANES), jnp.float32))

    in_bytes = sum(int(np.prod(a.shape)) * a.dtype.itemsize
                   for a in (x, w_fused, misc, edge_t))
    out_bytes = sum(int(np.prod(s.shape)) * np.dtype(s.dtype).itemsize
                    for s in out_shape)
    # Explicit VMEM budget (v7x only has 64 MiB physical); generous slack.
    vmem_limit = int(min(max(4 * (in_bytes + out_bytes) + (2 << 20), 8 << 20), 48 << 20))

    kernel = functools.partial(
        _hierent_kernel, batch=B, n_ents_pad=e_pad, tgt_pad=t_pad, hidden=H,
        n_sent=n_sent, max_para=max_para, compute_attn_para=compute_attn_para)
    vmem = pl.BlockSpec(memory_space=pltpu.MemorySpace.VMEM)
    # TODO(synk): at production B / tgt_len, add a batch grid with
    # dimension_semantics=("parallel",) so v7x's two TensorCores share the work;
    # at these tiny sizes the per-step pipeline overhead (~0.35 us) would dominate.
    outs = pl.pallas_call(
        kernel,
        out_shape=tuple(out_shape),
        in_specs=[vmem] * 4,
        out_specs=tuple([vmem] * len(out_shape)),
        compiler_params=pltpu.CompilerParams(vmem_limit_bytes=vmem_limit),
    )(x, w_fused, misc, edge_t)

    topk = outs[0][:, :tgt_len, :max_para]
    attn_para = outs[1][:, :tgt_len, :n_sent] if compute_attn_para else None
    return topk, attn_para


def hierent_attention_forward(ent, ent_mask, edge, inputs, src, src_features,
                              padding_idx, params, max_para=5):
    """Full forward pass: returns (selected_features, selected_mask)."""
    sel, _ = hierent_topk(ent, ent_mask, edge, inputs,
                          params["w_ent"], params["b_ent"],
                          params["w_input"], params["b_input"],
                          max_para=max_para, compute_attn_para=False)

    B, tgt_len, _k = sel.shape
    H = src_features.shape[-1]

    # index_select over the paragraph axis (plain JAX glue).
    def gather_one(sf_b, src_b, sel_b):
        idx = sel_b.reshape(-1)                      # (tgt_len * max_para,)
        f = jnp.take(sf_b, idx, axis=0)              # (T*K, para_len, H)
        w = jnp.take(src_b, idx, axis=0)             # (T*K, para_len)
        return f, w

    feats, words = jax.vmap(gather_one)(src_features, src, sel)
    selected_features = feats.reshape(B * tgt_len, -1, H)
    selected_words = words.reshape(B * tgt_len, -1)
    selected_mask = selected_words != padding_idx    # ~eq(padding_idx)
    return selected_features, selected_mask


if __name__ == "__main__":
    B, n_ents, H = 2, 16, 32
    tgt_len, n_para, para_len = 8, 16, 4
    max_para, padding_idx = 5, 0

    ks = jax.random.split(jax.random.PRNGKey(0), 10)
    ent = jax.random.normal(ks[0], (B, n_ents, H), jnp.float32)
    inputs = jax.random.normal(ks[1], (B, tgt_len, H), jnp.float32)
    edge = (jax.random.uniform(ks[2], (B, n_para, n_ents)) > 0.5).astype(jnp.float32)
    ent_mask = (jax.random.uniform(ks[3], (B, n_ents)) > 0.8).astype(jnp.int32)
    src = jax.random.randint(ks[4], (B, n_para, para_len), 0, 50, dtype=jnp.int32)
    src_features = jax.random.normal(ks[5], (B, n_para, para_len, H), jnp.float32)

    # Deterministic synthetic parameters (nn.Linear(model_dim, model_dim) x2).
    params = {
        "w_input": jax.random.normal(ks[6], (H, H), jnp.float32) * 0.1,
        "b_input": jax.random.normal(ks[7], (H,), jnp.float32) * 0.1,
        "w_ent":   jax.random.normal(ks[8], (H, H), jnp.float32) * 0.1,
        "b_ent":   jax.random.normal(ks[9], (H,), jnp.float32) * 0.1,
    }

    # Full forward pass (top-k-only kernel variant, no attn_para writeback).
    selected_features, selected_mask = hierent_attention_forward(
        ent, ent_mask, edge, inputs, src, src_features, padding_idx, params,
        max_para=max_para)
    jax.block_until_ready((selected_features, selected_mask))

    # ---- Numerical checks against a pure-f32 JAX reference. ----
    topk_full, attn_para_kernel = hierent_topk(
        ent, ent_mask, edge, inputs,
        params["w_ent"], params["b_ent"],
        params["w_input"], params["b_input"],
        max_para=max_para, compute_attn_para=True)
    topk_fast, _ = hierent_topk(
        ent, ent_mask, edge, inputs,
        params["w_ent"], params["b_ent"],
        params["w_input"], params["b_input"],
        max_para=max_para, compute_attn_para=False)

    key_ref = ent @ params["w_ent"].T + params["b_ent"]
    query_ref = inputs @ params["w_input"].T + params["b_input"]
    scores_ref = jnp.einsum("bth,beh->bte", query_ref, key_ref)
    scores_ref = jnp.where(ent_mask[:, None, :] > 0, -1e18, scores_ref)
    attn_ref = jax.nn.softmax(scores_ref, axis=-1)
    attn_para_ref = jnp.einsum("bte,bse->bts", attn_ref, edge)

    # attn_para values (bf16 MXU operands + approx reciprocal -> loose tol).
    np.testing.assert_allclose(np.asarray(attn_para_kernel),
                               np.asarray(attn_para_ref),
                               rtol=5e-2, atol=1e-2)
    # Both kernel variants must agree exactly on the indices.
    assert np.array_equal(np.asarray(topk_full), np.asarray(topk_fast))
    # Value-based top-k check (tolerant to near-tie index swaps).
    ref_np = np.asarray(attn_para_ref)
    ref_sorted = -np.sort(-ref_np, axis=-1)[..., :max_para]
    got_vals = np.take_along_axis(ref_np, np.asarray(topk_full), axis=-1)
    np.testing.assert_allclose(got_vals, ref_sorted, rtol=5e-2, atol=1e-2)

    print("KERNEL_OK")
</pallas_src>

<mosaic_0001>
module attributes {stable_mosaic.version = 11 : i64} {
  func.func @_hierent_kernel(%arg0: memref<48x32xbf16, #tpu.memory_space<vmem>>, %arg1: memref<32x128xbf16, #tpu.memory_space<vmem>>, %arg2: memref<3x128xf32, #tpu.memory_space<vmem>>, %arg3: memref<2x16x128xbf16, #tpu.memory_space<vmem>>, %arg4: memref<2x8x128xi32, #tpu.memory_space<vmem>>) attributes {dimension_semantics = [], scalar_prefetch = 0 : i64, scratch_operands = 0 : i64, tpu.core_type = #tpu.core_type<tc>} {
    %c0 = arith.constant 0 : index
    %c0_0 = arith.constant 0 : index
    %0 = vector.load %arg2[%c0, %c0_0] : memref<3x128xf32, #tpu.memory_space<vmem>>, vector<3x128xf32>
    %c0_1 = arith.constant 0 : index
    %c0_2 = arith.constant 0 : index
    %1 = vector.load %arg0[%c0_1, %c0_2] : memref<48x32xbf16, #tpu.memory_space<vmem>>, vector<48x32xbf16>
    %c0_3 = arith.constant 0 : index
    %c0_4 = arith.constant 0 : index
    %2 = vector.load %arg1[%c0_3, %c0_4] : memref<32x128xbf16, #tpu.memory_space<vmem>>, vector<32x128xbf16>
    %cst = arith.constant dense<0.000000e+00> : vector<48x128xf32>
    %3 = tpu.matmul %1, %2, %cst {dimension_numbers = #tpu.dot_dimension_numbers<[1], [0], [0], [1], [0, 0, 1, 1], [], []>} : vector<48x32xbf16>, vector<32x128xbf16>, vector<48x128xf32> -> vector<48x128xf32>
    %4 = vector.extract_strided_slice %0 {offsets = [0, 0], sizes = [1, 128], strides = [1, 1]} : vector<3x128xf32> to vector<1x128xf32>
    %5 = vector.broadcast %4 : vector<1x128xf32> to vector<48x128xf32>
    %6 = arith.addf %3, %5 : vector<48x128xf32>
    %7 = vector.extract_strided_slice %6 {offsets = [0, 0], sizes = [32, 32], strides = [1, 1]} : vector<48x128xf32> to vector<32x32xf32>
    %8 = vector.extract_strided_slice %6 {offsets = [32, 32], sizes = [16, 32], strides = [1, 1]} : vector<48x128xf32> to vector<16x32xf32>
    %9 = tpu.iota {dimensions = array<i32: 1>} : vector<8x128xi32>
    %10 = vector.extract_strided_slice %8 {offsets = [0, 0], sizes = [8, 32], strides = [1, 1]} : vector<16x32xf32> to vector<8x32xf32>
    %11 = arith.truncf %10 : vector<8x32xf32> to vector<8x32xbf16>
    %12 = vector.extract_strided_slice %7 {offsets = [0, 0], sizes = [16, 32], strides = [1, 1]} : vector<32x32xf32> to vector<16x32xf32>
    %13 = arith.truncf %12 : vector<16x32xf32> to vector<16x32xbf16>
    %cst_5 = arith.constant dense<0.000000e+00> : vector<8x16xf32>
    %14 = tpu.matmul %11, %13, %cst_5 {dimension_numbers = #tpu.dot_dimension_numbers<[1], [1], [0], [0], [0, 0, 1, 0], [], []>} : vector<8x32xbf16>, vector<16x32xbf16>, vector<8x16xf32> -> vector<8x16xf32>
    %15 = vector.extract_strided_slice %0 {offsets = [1, 0], sizes = [1, 16], strides = [1, 1]} : vector<3x128xf32> to vector<1x16xf32>
    %16 = vector.broadcast %15 : vector<1x16xf32> to vector<8x16xf32>
    %17 = arith.addf %14, %16 : vector<8x16xf32>
    %cst_6 = arith.constant dense<0xFF800000> : vector<8xf32>
    %18 = vector.multi_reduction <maximumf>, %17, %cst_6 [1] : vector<8x16xf32> to vector<8xf32>
    %19 = vector.shape_cast %18 : vector<8xf32> to vector<8x1xf32>
    %20 = vector.broadcast %19 : vector<8x1xf32> to vector<8x16xf32>
    %21 = arith.subf %17, %20 : vector<8x16xf32>
    %22 = math.exp %21 : vector<8x16xf32>
    %23 = arith.truncf %22 : vector<8x16xf32> to vector<8x16xbf16>
    %c0_7 = arith.constant 0 : index
    %c0_8 = arith.constant 0 : index
    %c0_9 = arith.constant 0 : index
    %24 = vector.load %arg3[%c0_7, %c0_8, %c0_9] : memref<2x16x128xbf16, #tpu.memory_space<vmem>>, vector<1x16x128xbf16>
    %25 = vector.shape_cast %24 : vector<1x16x128xbf16> to vector<16x128xbf16>
    %cst_10 = arith.constant dense<0.000000e+00> : vector<8x128xf32>
    %26 = tpu.matmul %23, %25, %cst_10 {dimension_numbers = #tpu.dot_dimension_numbers<[1], [0], [0], [1], [0, 0, 1, 1], [], []>} : vector<8x16xbf16>, vector<16x128xbf16>, vector<8x128xf32> -> vector<8x128xf32>
    %27 = tpu.bitcast %26 : vector<8x128xf32> -> vector<8x128xi32>
    %c31_i32 = arith.constant 31 : i32
    %28 = vector.broadcast %c31_i32 : i32 to vector<8x128xi32>
    %29 = arith.shrsi %27, %28 : vector<8x128xi32>
    %c2147483647_i32 = arith.constant 2147483647 : i32
    %30 = vector.broadcast %c2147483647_i32 : i32 to vector<8x128xi32>
    %31 = arith.andi %29, %30 : vector<8x128xi32>
    %32 = arith.xori %27, %31 : vector<8x128xi32>
    %c-256_i32 = arith.constant -256 : i32
    %33 = vector.broadcast %c-256_i32 : i32 to vector<8x128xi32>
    %34 = arith.andi %32, %33 : vector<8x128xi32>
    %c255_i32 = arith.constant 255 : i32
    %35 = vector.broadcast %c255_i32 : i32 to vector<8x128xi32>
    %36 = arith.subi %35, %9 : vector<8x128xi32>
    %37 = arith.ori %34, %36 : vector<8x128xi32>
    %c16_i32 = arith.constant 16 : i32
    %38 = vector.broadcast %c16_i32 : i32 to vector<8x128xi32>
    %39 = arith.cmpi slt, %9, %38 : vector<8x128xi32>
    %c-2147483648_i32 = arith.constant -2147483648 : i32
    %40 = vector.broadcast %c-2147483648_i32 : i32 to vector<8x128xi32>
    %41 = arith.select %39, %37, %40 : vector<8x128xi1>, vector<8x128xi32>
    %c0_i32 = arith.constant 0 : i32
    %42 = vector.broadcast %c0_i32 : i32 to vector<8x128xi32>
    %cst_11 = arith.constant dense<-2147483648> : vector<8xi32>
    %43 = vector.multi_reduction <maxsi>, %41, %cst_11 [1] : vector<8x128xi32> to vector<8xi32>
    %44 = vector.shape_cast %43 : vector<8xi32> to vector<8x1xi32>
    %c255_i32_12 = arith.constant 255 : i32
    %45 = vector.broadcast %c255_i32_12 : i32 to vector<8x1xi32>
    %46 = arith.andi %44, %45 : vector<8x1xi32>
    %c255_i32_13 = arith.constant 255 : i32
    %47 = vector.broadcast %c255_i32_13 : i32 to vector<8x1xi32>
    %48 = arith.subi %47, %46 : vector<8x1xi32>
    %c0_i32_14 = arith.constant 0 : i32
    %49 = vector.broadcast %c0_i32_14 : i32 to vector<8x128xi32>
    %50 = arith.cmpi eq, %9, %49 : vector<8x128xi32>
    %51 = vector.shape_cast %48 : vector<8x1xi32> to vector<8x1xi32>
    %52 = vector.broadcast %51 : vector<8x1xi32> to vector<8x128xi32>
    %53 = arith.select %50, %52, %42 : vector<8x128xi1>, vector<8x128xi32>
    %54 = vector.broadcast %48 : vector<8x1xi32> to vector<8x128xi32>
    %55 = arith.cmpi eq, %9, %54 : vector<8x128xi32>
    %c-2147483648_i32_15 = arith.constant -2147483648 : i32
    %56 = vector.broadcast %c-2147483648_i32_15 : i32 to vector<8x128xi32>
    %57 = arith.select %55, %56, %41 : vector<8x128xi1>, vector<8x128xi32>
    %cst_16 = arith.constant dense<-2147483648> : vector<8xi32>
    %58 = vector.multi_reduction <maxsi>, %57, %cst_16 [1] : vector<8x128xi32> to vector<8xi32>
    %59 = vector.shape_cast %58 : vector<8xi32> to vector<8x1xi32>
    %c255_i32_17 = arith.constant 255 : i32
    %60 = vector.broadcast %c255_i32_17 : i32 to vector<8x1xi32>
    %61 = arith.andi %59, %60 : vector<8x1xi32>
    %c255_i32_18 = arith.constant 255 : i32
    %62 = vector.broadcast %c255_i32_18 : i32 to vector<8x1xi32>
    %63 = arith.subi %62, %61 : vector<8x1xi32>
    %c1_i32 = arith.constant 1 : i32
    %64 = vector.broadcast %c1_i32 : i32 to vector<8x128xi32>
    %65 = arith.cmpi eq, %9, %64 : vector<8x128xi32>
    %66 = vector.shape_cast %63 : vector<8x1xi32> to vector<8x1xi32>
    %67 = vector.broadcast %66 : vector<8x1xi32> to vector<8x128xi32>
    %68 = arith.select %65, %67, %53 : vector<8x128xi1>, vector<8x128xi32>
    %69 = vector.broadcast %63 : vector<8x1xi32> to vector<8x128xi32>
    %70 = arith.cmpi eq, %9, %69 : vector<8x128xi32>
    %c-2147483648_i32_19 = arith.constant -2147483648 : i32
    %71 = vector.broadcast %c-2147483648_i32_19 : i32 to vector<8x128xi32>
    %72 = arith.select %70, %71, %57 : vector<8x128xi1>, vector<8x128xi32>
    %cst_20 = arith.constant dense<-2147483648> : vector<8xi32>
    %73 = vector.multi_reduction <maxsi>, %72, %cst_20 [1] : vector<8x128xi32> to vector<8xi32>
    %74 = vector.shape_cast %73 : vector<8xi32> to vector<8x1xi32>
    %c255_i32_21 = arith.constant 255 : i32
    %75 = vector.broadcast %c255_i32_21 : i32 to vector<8x1xi32>
    %76 = arith.andi %74, %75 : vector<8x1xi32>
    %c255_i32_22 = arith.constant 255 : i32
    %77 = vector.broadcast %c255_i32_22 : i32 to vector<8x1xi32>
    %78 = arith.subi %77, %76 : vector<8x1xi32>
    %c2_i32 = arith.constant 2 : i32
    %79 = vector.broadcast %c2_i32 : i32 to vector<8x128xi32>
    %80 = arith.cmpi eq, %9, %79 : vector<8x128xi32>
    %81 = vector.shape_cast %78 : vector<8x1xi32> to vector<8x1xi32>
    %82 = vector.broadcast %81 : vector<8x1xi32> to vector<8x128xi32>
    %83 = arith.select %80, %82, %68 : vector<8x128xi1>, vector<8x128xi32>
    %84 = vector.broadcast %78 : vector<8x1xi32> to vector<8x128xi32>
    %85 = arith.cmpi eq, %9, %84 : vector<8x128xi32>
    %c-2147483648_i32_23 = arith.constant -2147483648 : i32
    %86 = vector.broadcast %c-2147483648_i32_23 : i32 to vector<8x128xi32>
    %87 = arith.select %85, %86, %72 : vector<8x128xi1>, vector<8x128xi32>
    %cst_24 = arith.constant dense<-2147483648> : vector<8xi32>
    %88 = vector.multi_reduction <maxsi>, %87, %cst_24 [1] : vector<8x128xi32> to vector<8xi32>
    %89 = vector.shape_cast %88 : vector<8xi32> to vector<8x1xi32>
    %c255_i32_25 = arith.constant 255 : i32
    %90 = vector.broadcast %c255_i32_25 : i32 to vector<8x1xi32>
    %91 = arith.andi %89, %90 : vector<8x1xi32>
    %c255_i32_26 = arith.constant 255 : i32
    %92 = vector.broadcast %c255_i32_26 : i32 to vector<8x1xi32>
    %93 = arith.subi %92, %91 : vector<8x1xi32>
    %c3_i32 = arith.constant 3 : i32
    %94 = vector.broadcast %c3_i32 : i32 to vector<8x128xi32>
    %95 = arith.cmpi eq, %9, %94 : vector<8x128xi32>
    %96 = vector.shape_cast %93 : vector<8x1xi32> to vector<8x1xi32>
    %97 = vector.broadcast %96 : vector<8x1xi32> to vector<8x128xi32>
    %98 = arith.select %95, %97, %83 : vector<8x128xi1>, vector<8x128xi32>
    %99 = vector.broadcast %93 : vector<8x1xi32> to vector<8x128xi32>
    %100 = arith.cmpi eq, %9, %99 : vector<8x128xi32>
    %c-2147483648_i32_27 = arith.constant -2147483648 : i32
    %101 = vector.broadcast %c-2147483648_i32_27 : i32 to vector<8x128xi32>
    %102 = arith.select %100, %101, %87 : vector<8x128xi1>, vector<8x128xi32>
    %cst_28 = arith.constant dense<-2147483648> : vector<8xi32>
    %103 = vector.multi_reduction <maxsi>, %102, %cst_28 [1] : vector<8x128xi32> to vector<8xi32>
    %104 = vector.shape_cast %103 : vector<8xi32> to vector<8x1xi32>
    %c255_i32_29 = arith.constant 255 : i32
    %105 = vector.broadcast %c255_i32_29 : i32 to vector<8x1xi32>
    %106 = arith.andi %104, %105 : vector<8x1xi32>
    %c255_i32_30 = arith.constant 255 : i32
    %107 = vector.broadcast %c255_i32_30 : i32 to vector<8x1xi32>
    %108 = arith.subi %107, %106 : vector<8x1xi32>
    %c4_i32 = arith.constant 4 : i32
    %109 = vector.broadcast %c4_i32 : i32 to vector<8x128xi32>
    %110 = arith.cmpi eq, %9, %109 : vector<8x128xi32>
    %111 = vector.shape_cast %108 : vector<8x1xi32> to vector<8x1xi32>
    %112 = vector.broadcast %111 : vector<8x1xi32> to vector<8x128xi32>
    %113 = arith.select %110, %112, %98 : vector<8x128xi1>, vector<8x128xi32>
    %c0_31 = arith.constant 0 : index
    %c0_32 = arith.constant 0 : index
    %c0_33 = arith.constant 0 : index
    %114 = vector.load %arg4[%c0_31, %c0_32, %c0_33] : memref<2x8x128xi32, #tpu.memory_space<vmem>>, vector<1x8x128xi32>
    %115 = vector.shape_cast %114 : vector<1x8x128xi32> to vector<8x128xi32>
    %116 = vector.shape_cast %113 : vector<8x128xi32> to vector<1x8x128xi32>
    tpu.vector_store %arg4[%c0_31, %c0_32, %c0_33], %116 {strides = array<i32>} : memref<2x8x128xi32, #tpu.memory_space<vmem>>, vector<1x8x128xi32>,
    %117 = vector.extract_strided_slice %8 {offsets = [8, 0], sizes = [8, 32], strides = [1, 1]} : vector<16x32xf32> to vector<8x32xf32>
    %118 = arith.truncf %117 : vector<8x32xf32> to vector<8x32xbf16>
    %119 = vector.extract_strided_slice %7 {offsets = [16, 0], sizes = [16, 32], strides = [1, 1]} : vector<32x32xf32> to vector<16x32xf32>
    %120 = arith.truncf %119 : vector<16x32xf32> to vector<16x32xbf16>
    %cst_34 = arith.constant dense<0.000000e+00> : vector<8x16xf32>
    %121 = tpu.matmul %118, %120, %cst_34 {dimension_numbers = #tpu.dot_dimension_numbers<[1], [1], [0], [0], [0, 0, 1, 0], [], []>} : vector<8x32xbf16>, vector<16x32xbf16>, vector<8x16xf32> -> vector<8x16xf32>
    %122 = vector.extract_strided_slice %0 {offsets = [2, 0], sizes = [1, 16], strides = [1, 1]} : vector<3x128xf32> to vector<1x16xf32>
    %123 = vector.broadcast %122 : vector<1x16xf32> to vector<8x16xf32>
    %124 = arith.addf %121, %123 : vector<8x16xf32>
    %cst_35 = arith.constant dense<0xFF800000> : vector<8xf32>
    %125 = vector.multi_reduction <maximumf>, %124, %cst_35 [1] : vector<8x16xf32> to vector<8xf32>
    %126 = vector.shape_cast %125 : vector<8xf32> to vector<8x1xf32>
    %127 = vector.broadcast %126 : vector<8x1xf32> to vector<8x16xf32>
    %128 = arith.subf %124, %127 : vector<8x16xf32>
    %129 = math.exp %128 : vector<8x16xf32>
    %130 = arith.truncf %129 : vector<8x16xf32> to vector<8x16xbf16>
    %c1 = arith.constant 1 : index
    %c0_36 = arith.constant 0 : index
    %c0_37 = arith.constant 0 : index
    %131 = vector.load %arg3[%c1, %c0_36, %c0_37] : memref<2x16x128xbf16, #tpu.memory_space<vmem>>, vector<1x16x128xbf16>
    %132 = vector.shape_cast %131 : vector<1x16x128xbf16> to vector<16x128xbf16>
    %cst_38 = arith.constant dense<0.000000e+00> : vector<8x128xf32>
    %133 = tpu.matmul %130, %132, %cst_38 {dimension_numbers = #tpu.dot_dimension_numbers<[1], [0], [0], [1], [0, 0, 1, 1], [], []>} : vector<8x16xbf16>, vector<16x128xbf16>, vector<8x128xf32> -> vector<8x128xf32>
    %134 = tpu.bitcast %133 : vector<8x128xf32> -> vector<8x128xi32>
    %c31_i32_39 = arith.constant 31 : i32
    %135 = vector.broadcast %c31_i32_39 : i32 to vector<8x128xi32>
    %136 = arith.shrsi %134, %135 : vector<8x128xi32>
    %c2147483647_i32_40 = arith.constant 2147483647 : i32
    %137 = vector.broadcast %c2147483647_i32_40 : i32 to vector<8x128xi32>
    %138 = arith.andi %136, %137 : vector<8x128xi32>
    %139 = arith.xori %134, %138 : vector<8x128xi32>
    %c-256_i32_41 = arith.constant -256 : i32
    %140 = vector.broadcast %c-256_i32_41 : i32 to vector<8x128xi32>
    %141 = arith.andi %139, %140 : vector<8x128xi32>
    %c255_i32_42 = arith.constant 255 : i32
    %142 = vector.broadcast %c255_i32_42 : i32 to vector<8x128xi32>
    %143 = arith.subi %142, %9 : vector<8x128xi32>
    %144 = arith.ori %141, %143 : vector<8x128xi32>
    %c16_i32_43 = arith.constant 16 : i32
    %145 = vector.broadcast %c16_i32_43 : i32 to vector<8x128xi32>
    %146 = arith.cmpi slt, %9, %145 : vector<8x128xi32>
    %c-2147483648_i32_44 = arith.constant -2147483648 : i32
    %147 = vector.broadcast %c-2147483648_i32_44 : i32 to vector<8x128xi32>
    %148 = arith.select %146, %144, %147 : vector<8x128xi1>, vector<8x128xi32>
    %c0_i32_45 = arith.constant 0 : i32
    %149 = vector.broadcast %c0_i32_45 : i32 to vector<8x128xi32>
    %cst_46 = arith.constant dense<-2147483648> : vector<8xi32>
    %150 = vector.multi_reduction <maxsi>, %148, %cst_46 [1] : vector<8x128xi32> to vector<8xi32>
    %151 = vector.shape_cast %150 : vector<8xi32> to vector<8x1xi32>
    %c255_i32_47 = arith.constant 255 : i32
    %152 = vector.broadcast %c255_i32_47 : i32 to vector<8x1xi32>
    %153 = arith.andi %151, %152 : vector<8x1xi32>
    %c255_i32_48 = arith.constant 255 : i32
    %154 = vector.broadcast %c255_i32_48 : i32 to vector<8x1xi32>
    %155 = arith.subi %154, %153 : vector<8x1xi32>
    %c0_i32_49 = arith.constant 0 : i32
    %156 = vector.broadcast %c0_i32_49 : i32 to vector<8x128xi32>
    %157 = arith.cmpi eq, %9, %156 : vector<8x128xi32>
    %158 = vector.shape_cast %155 : vector<8x1xi32> to vector<8x1xi32>
    %159 = vector.broadcast %158 : vector<8x1xi32> to vector<8x128xi32>
    %160 = arith.select %157, %159, %149 : vector<8x128xi1>, vector<8x128xi32>
    %161 = vector.broadcast %155 : vector<8x1xi32> to vector<8x128xi32>
    %162 = arith.cmpi eq, %9, %161 : vector<8x128xi32>
    %c-2147483648_i32_50 = arith.constant -2147483648 : i32
    %163 = vector.broadcast %c-2147483648_i32_50 : i32 to vector<8x128xi32>
    %164 = arith.select %162, %163, %148 : vector<8x128xi1>, vector<8x128xi32>
    %cst_51 = arith.constant dense<-2147483648> : vector<8xi32>
    %165 = vector.multi_reduction <maxsi>, %164, %cst_51 [1] : vector<8x128xi32> to vector<8xi32>
    %166 = vector.shape_cast %165 : vector<8xi32> to vector<8x1xi32>
    %c255_i32_52 = arith.constant 255 : i32
    %167 = vector.broadcast %c255_i32_52 : i32 to vector<8x1xi32>
    %168 = arith.andi %166, %167 : vector<8x1xi32>
    %c255_i32_53 = arith.constant 255 : i32
    %169 = vector.broadcast %c255_i32_53 : i32 to vector<8x1xi32>
    %170 = arith.subi %169, %168 : vector<8x1xi32>
    %c1_i32_54 = arith.constant 1 : i32
    %171 = vector.broadcast %c1_i32_54 : i32 to vector<8x128xi32>
    %172 = arith.cmpi eq, %9, %171 : vector<8x128xi32>
    %173 = vector.shape_cast %170 : vector<8x1xi32> to vector<8x1xi32>
    %174 = vector.broadcast %173 : vector<8x1xi32> to vector<8x128xi32>
    %175 = arith.select %172, %174, %160 : vector<8x128xi1>, vector<8x128xi32>
    %176 = vector.broadcast %170 : vector<8x1xi32> to vector<8x128xi32>
    %177 = arith.cmpi eq, %9, %176 : vector<8x128xi32>
    %c-2147483648_i32_55 = arith.constant -2147483648 : i32
    %178 = vector.broadcast %c-2147483648_i32_55 : i32 to vector<8x128xi32>
    %179 = arith.select %177, %178, %164 : vector<8x128xi1>, vector<8x128xi32>
    %cst_56 = arith.constant dense<-2147483648> : vector<8xi32>
    %180 = vector.multi_reduction <maxsi>, %179, %cst_56 [1] : vector<8x128xi32> to vector<8xi32>
    %181 = vector.shape_cast %180 : vector<8xi32> to vector<8x1xi32>
    %c255_i32_57 = arith.constant 255 : i32
    %182 = vector.broadcast %c255_i32_57 : i32 to vector<8x1xi32>
    %183 = arith.andi %181, %182 : vector<8x1xi32>
    %c255_i32_58 = arith.constant 255 : i32
    %184 = vector.broadcast %c255_i32_58 : i32 to vector<8x1xi32>
    %185 = arith.subi %184, %183 : vector<8x1xi32>
    %c2_i32_59 = arith.constant 2 : i32
    %186 = vector.broadcast %c2_i32_59 : i32 to vector<8x128xi32>
    %187 = arith.cmpi eq, %9, %186 : vector<8x128xi32>
    %188 = vector.shape_cast %185 : vector<8x1xi32> to vector<8x1xi32>
    %189 = vector.broadcast %188 : vector<8x1xi32> to vector<8x128xi32>
    %190 = arith.select %187, %189, %175 : vector<8x128xi1>, vector<8x128xi32>
    %191 = vector.broadcast %185 : vector<8x1xi32> to vector<8x128xi32>
    %192 = arith.cmpi eq, %9, %191 : vector<8x128xi32>
    %c-2147483648_i32_60 = arith.constant -2147483648 : i32
    %193 = vector.broadcast %c-2147483648_i32_60 : i32 to vector<8x128xi32>
    %194 = arith.select %192, %193, %179 : vector<8x128xi1>, vector<8x128xi32>
    %cst_61 = arith.constant dense<-2147483648> : vector<8xi32>
    %195 = vector.multi_reduction <maxsi>, %194, %cst_61 [1] : vector<8x128xi32> to vector<8xi32>
    %196 = vector.shape_cast %195 : vector<8xi32> to vector<8x1xi32>
    %c255_i32_62 = arith.constant 255 : i32
    %197 = vector.broadcast %c255_i32_62 : i32 to vector<8x1xi32>
    %198 = arith.andi %196, %197 : vector<8x1xi32>
    %c255_i32_63 = arith.constant 255 : i32
    %199 = vector.broadcast %c255_i32_63 : i32 to vector<8x1xi32>
    %200 = arith.subi %199, %198 : vector<8x1xi32>
    %c3_i32_64 = arith.constant 3 : i32
    %201 = vector.broadcast %c3_i32_64 : i32 to vector<8x128xi32>
    %202 = arith.cmpi eq, %9, %201 : vector<8x128xi32>
    %203 = vector.shape_cast %200 : vector<8x1xi32> to vector<8x1xi32>
    %204 = vector.broadcast %203 : vector<8x1xi32> to vector<8x128xi32>
    %205 = arith.select %202, %204, %190 : vector<8x128xi1>, vector<8x128xi32>
    %206 = vector.broadcast %200 : vector<8x1xi32> to vector<8x128xi32>
    %207 = arith.cmpi eq, %9, %206 : vector<8x128xi32>
    %c-2147483648_i32_65 = arith.constant -2147483648 : i32
    %208 = vector.broadcast %c-2147483648_i32_65 : i32 to vector<8x128xi32>
    %209 = arith.select %207, %208, %194 : vector<8x128xi1>, vector<8x128xi32>
    %cst_66 = arith.constant dense<-2147483648> : vector<8xi32>
    %210 = vector.multi_reduction <maxsi>, %209, %cst_66 [1] : vector<8x128xi32> to vector<8xi32>
    %211 = vector.shape_cast %210 : vector<8xi32> to vector<8x1xi32>
    %c255_i32_67 = arith.constant 255 : i32
    %212 = vector.broadcast %c255_i32_67 : i32 to vector<8x1xi32>
    %213 = arith.andi %211, %212 : vector<8x1xi32>
    %c255_i32_68 = arith.constant 255 : i32
    %214 = vector.broadcast %c255_i32_68 : i32 to vector<8x1xi32>
    %215 = arith.subi %214, %213 : vector<8x1xi32>
    %c4_i32_69 = arith.constant 4 : i32
    %216 = vector.broadcast %c4_i32_69 : i32 to vector<8x128xi32>
    %217 = arith.cmpi eq, %9, %216 : vector<8x128xi32>
    %218 = vector.shape_cast %215 : vector<8x1xi32> to vector<8x1xi32>
    %219 = vector.broadcast %218 : vector<8x1xi32> to vector<8x128xi32>
    %220 = arith.select %217, %219, %205 : vector<8x128xi1>, vector<8x128xi32>
    %c1_70 = arith.constant 1 : index
    %c0_71 = arith.constant 0 : index
    %c0_72 = arith.constant 0 : index
    %221 = vector.load %arg4[%c1_70, %c0_71, %c0_72] : memref<2x8x128xi32, #tpu.memory_space<vmem>>, vector<1x8x128xi32>
    %222 = vector.shape_cast %221 : vector<1x8x128xi32> to vector<8x128xi32>
    %223 = vector.shape_cast %220 : vector<8x128xi32> to vector<1x8x128xi32>
    tpu.vector_store %arg4[%c1_70, %c0_71, %c0_72], %223 {strides = array<i32>} : memref<2x8x128xi32, #tpu.memory_space<vmem>>, vector<1x8x128xi32>,
    return
  }
}

</mosaic_0001>

<llo_original>
// kernel: hierent_topk.1
$region0: #{hierent_topk.1}
  #allocation0 [shape = 'u32[]', space=smem, size = 0x4, offset = 0x4, fixed_abs, tag = 'smem constant byte address 0x4 - core index']
  #allocation1 [shape = 'u32[72,128]{1,0:T(1,128)}', space=vmem, size = 0x9000, scoped, tag = 'internal scratch']
  %s0 = inlined_call_operand.vmem [shape: bf16[48,32], index: 0, kind: input, shape index: {}]
  %s1 = inlined_call_operand.vmem [shape: bf16[32,128], index: 1, kind: input, shape index: {}]
  %s2 = inlined_call_operand.vmem [shape: f32[3,128], index: 2, kind: input, shape index: {}]
  %s3 = inlined_call_operand.vmem [shape: bf16[2,16,128], index: 3, kind: input, shape index: {}]
  %s4 = inlined_call_operand.vmem [shape: s32[2,8,128], index: 4, kind: output, shape index: {}]
  %s5 = sld [smem:[#allocation0]]
  $region26: #{hierent_topk.1} parent=0
    _
  %s7 = ssub.s32 1, %s5
  %s8 = scalar_select 0, %s7, %s5
  // Predicated region
  $region2: #{hierent_topk.1} parent=0 // pred_check
    _
  $region3: #{hierent_topk.1} parent=0 // pred_check_branch
    %10 = sbr.rel (0) target = $region5
  $region4: #{hierent_topk.1} parent=0 // pred_region
    _
  $region5: #{hierent_topk.1} parent=0 // pred_fallthru
    _
  // Predicated region
  $region6: #{hierent_topk.1} parent=0 // pred_check
    _
  $region7: #{hierent_topk.1} parent=0 // pred_check_branch
    %12 = sbr.rel (0) target = $region9
  $region8: #{hierent_topk.1} parent=0 // pred_region
    _
  $region9: #{hierent_topk.1} parent=0 // pred_fallthru
    _
  // Predicated region
  $region10: #{hierent_topk.1} parent=0 // pred_check
    _
  $region11: #{hierent_topk.1} parent=0 // pred_check_branch
    %14 = sbr.rel (0) target = $region13
  $region12: #{hierent_topk.1} parent=0 // pred_region
    _
  $region13: #{hierent_topk.1} parent=0 // pred_fallthru
    _
  // Predicated region
  $region14: #{hierent_topk.1} parent=0 // pred_check
    _
  $region15: #{hierent_topk.1} parent=0 // pred_check_branch
    %16 = sbr.rel (0) target = $region17
  $region16: #{hierent_topk.1} parent=0 // pred_region
    _
  $region17: #{hierent_topk.1} parent=0 // pred_fallthru
    _
  %v18 = vld [vmem:[%s2] sm:$0x7]
  %v19 = vld [vmem:[%s0] sm:$0xf]
  %v20 = vld [vmem:[%s0 + $0x4] sm:$0xf]
  %v21 = vld [vmem:[%s0 + $0x8] sm:$0xf]
  %v22 = vld [vmem:[%s0 + $0xc] sm:$0xf]
  %v23 = vld [vmem:[%s0 + $0x10] sm:$0xf]
  %v24 = vld [vmem:[%s0 + $0x14] sm:$0xf]
  %v25 = vld [vmem:[%s1] sm:$0xf]
  %v26 = vld [vmem:[%s1 + $0x4] sm:$0xf]
  %v27 = vld [vmem:[%s1 + $0x8] sm:$0xf]
  %v28 = vld [vmem:[%s1 + $0xc] sm:$0xf]
  %v29 = vperm.slane %v18, 0
  %v36 = vunpack.c.l.b16 %v19
  %v37 = vunpack.c.l.b16 %v20
  %v38 = vunpack.c.l.b16 %v21
  %v39 = vunpack.c.l.b16 %v22
  %v40 = vunpack.c.l.b16 %v23
  %v41 = vunpack.c.l.b16 %v24
  %v42 = vpack.c.b16 %v37, %v36
  %v43 = vpack.c.b16 %v39, %v38
  %v44 = vpack.c.b16 %v41, %v40
  %v49 = vunpack.c.l.b16 %v25
  %v50 = vunpack.c.l.b16 %v26
  %v51 = vunpack.c.l.b16 %v27
  %v52 = vunpack.c.l.b16 %v28
  %v53 = vpack.c.b16 %v50, %v49
  %v54 = vpack.c.b16 %v52, %v51
  %vm57 = vcmask 261120
  %v59 = vsel %vm57, %v42, 0
  %v62 = vsel %vm57, %v43, 0
  %v65 = vsel %vm57, %v44, 0
  %67 = vmatpush.bf16.msra.mxu0 0
  %68 = vmatpush.bf16.msra.mxu0 0
  %69 = vmatpush.bf16.msra.mxu0 0
  %70 = vmatpush.bf16.msra.mxu0 0
  %71 = vmatpush.bf16.msra.mxu0 0
  %72 = vmatpush.bf16.msra.mxu0 0
  %73 = vmatpush.bf16.msra.mxu0 %v54
  %74 = vmatpush.bf16.msra.mxu0 %v53
  %75 = vmatmul.bf16.gmra.mxu0 %v59
  %v76 = vpop.f32.mrf.mxu0
  %v77 = vadd.f32 %v29, %v76
  %v78 = vpop.f32.mrf.mxu0
  %v79 = vadd.f32 %v29, %v78
  %80 = vmatmul.bf16.gmra.mxu0 %v62
  %v81 = vpop.f32.mrf.mxu0
  %v82 = vadd.f32 %v29, %v81
  %v83 = vpop.f32.mrf.mxu0
  %v84 = vadd.f32 %v29, %v83
  %85 = vmatmul.bf16.gmra.mxu0 %v65
  %v86 = vpop.f32.mrf.mxu0
  %v87 = vadd.f32 %v29, %v86
  %v88 = vpop.f32.mrf.mxu0
  %v89 = vadd.f32 %v29, %v88
  %90 = vdwg.mxu0
  %v91 = vlaneseq
  %v92 = vand.u32 %v91, 127
  %v93 = vpack.c.bf16 %v87, %v87
  %v94 = vpack.c.bf16 %v79, %v77
  %v95 = vperm.slane %v18, 1
  %97 = vrot.lane.b32.xlu0 %v93, 96
  %v98 = vpop.permute.xlu0 %97
  %v100 = vsel %vm57, %v98, 0
  %v103 = vsel %vm57, %v94, 0
  %105 = vmatpush.bf16.xpose.msra.mxu0 0
  %106 = vmatpush.bf16.xpose.msra.mxu0 0
  %107 = vmatpush.bf16.xpose.msra.mxu0 0
  %108 = vmatpush.bf16.xpose.msra.mxu0 0
  %109 = vmatpush.bf16.xpose.msra.mxu0 0
  %110 = vmatpush.bf16.xpose.msra.mxu0 0
  %111 = vmatpush.bf16.xpose.msra.mxu0 0
  %112 = vmatpush.bf16.xpose.msra.mxu0 %v103
  %113 = vmatmul.bf16.gmra.mxu0 %v100
  %v114 = vpop.f32.mrf.mxu0
  %v115 = vadd.f32 %v95, %v114
  %v116 = vpop.f32.mrf.mxu0
  %117 = vdwg.mxu0
  %vm118 = vcmask 130048
  %v119 = vsel %vm118, %v115, -inf
  %120 = vmax.xlane.f32.xlu0 %v119
  %v121 = vpop.xlane.xlu0 %120
  %v122 = vsub.f32 %v115, %v121
  %v123 = vmul.f32 %v122, 1.442695
  %v124 = vpow.pop %v123
  %v125 = vpack.c.bf16 %v124, %v124
  %v126 = vld [vmem:[%s3] sm:$0xf]
  %v127 = vld [vmem:[%s3 + $0x4] sm:$0xf]
  %v130 = vunpack.c.l.b16 %v126
  %v131 = vunpack.c.l.b16 %v127
  %v132 = vpack.c.b16 %v131, %v130
  %v135 = vsel %vm118, %v125, 0
  %137 = vmatpush.bf16.msra.mxu0 0
  %138 = vmatpush.bf16.msra.mxu0 0
  %139 = vmatpush.bf16.msra.mxu0 0
  %140 = vmatpush.bf16.msra.mxu0 0
  %141 = vmatpush.bf16.msra.mxu0 0
  %142 = vmatpush.bf16.msra.mxu0 0
  %143 = vmatpush.bf16.msra.mxu0 0
  %144 = vmatpush.bf16.msra.mxu0 %v132
  %145 = vmatmul.bf16.gmra.mxu0 %v135
  %v146 = vpop.f32.mrf.mxu0
  %v147 = vadd.f32 0.0, %v146
  %v148 = vpop.f32.mrf.mxu0
  %149 = vdwg.mxu0
  %v151 = vshra.s32 %v147, 31
  %v152 = vand.u32 %v151, 2147483647
  %v153 = vxor.u32 %v147, %v152
  %v154 = vand.u32 %v153, 4294967040
  %v155 = vsub.s32 255, %v92
  %v156 = vor.u32 %v154, %v155
  %vm157 = vcmp.lt.s32.totalorder %v92, 16
  %v158 = vsel %vm157, %v156, 2147483648
  %v159 = vand.u32 %v158, 65535
  %v160 = vshra.s32 %v158, 16
  %v161 = vcvt.s32.f32 %v159
  %v162 = vcvt.s32.f32 %v160
  %163 = vmax.xlane.f32.xlu0 %v162
  %v164 = vpop.xlane.xlu0 %163
  %vm165 = vcmp.eq.f32.partialorder %v162, %v164
  %v166 = vsel %vm165, %v161, -inf
  %167 = vmax.xlane.f32.xlu0 %v166
  %v168 = vpop.xlane.xlu0 %167
  %v169 = vcvt.f32.s32 %v168
  %v170 = vcvt.f32.s32 %v164
  %v171 = vshll.u32 %v170, 16
  %v172 = vadd.s32 %v171, %v169
  %v173 = vand.u32 %v172, 255
  %v174 = vsub.s32 255, %v173
  %vm175 = vcmp.eq.s32.totalorder %v92, 0
  %v176 = vsel %vm175, %v174, 0
  %vm177 = vcmp.eq.s32.totalorder %v92, %v174
  %v178 = vsel %vm177, 2147483648, %v158
  %v179 = vand.u32 %v178, 65535
  %v180 = vshra.s32 %v178, 16
  %v181 = vcvt.s32.f32 %v179
  %v182 = vcvt.s32.f32 %v180
  %183 = vmax.xlane.f32.xlu0 %v182
  %v184 = vpop.xlane.xlu0 %183
  %vm185 = vcmp.eq.f32.partialorder %v182, %v184
  %v186 = vsel %vm185, %v181, -inf
  %187 = vmax.xlane.f32.xlu0 %v186
  %v188 = vpop.xlane.xlu0 %187
  %v189 = vcvt.f32.s32 %v188
  %v190 = vcvt.f32.s32 %v184
  %v191 = vshll.u32 %v190, 16
  %v192 = vadd.s32 %v191, %v189
  %v193 = vand.u32 %v192, 255
  %v194 = vsub.s32 255, %v193
  %vm195 = vcmp.eq.s32.totalorder %v92, 1
  %v196 = vsel %vm195, %v194, %v176
  %vm197 = vcmp.eq.s32.totalorder %v92, %v194
  %v198 = vsel %vm197, 2147483648, %v178
  %v199 = vand.u32 %v198, 65535
  %v200 = vshra.s32 %v198, 16
  %v201 = vcvt.s32.f32 %v199
  %v202 = vcvt.s32.f32 %v200
  %203 = vmax.xlane.f32.xlu0 %v202
  %v204 = vpop.xlane.xlu0 %203
  %vm205 = vcmp.eq.f32.partialorder %v202, %v204
  %v206 = vsel %vm205, %v201, -inf
  %207 = vmax.xlane.f32.xlu0 %v206
  %v208 = vpop.xlane.xlu0 %207
  %v209 = vcvt.f32.s32 %v208
  %v210 = vcvt.f32.s32 %v204
  %v211 = vshll.u32 %v210, 16
  %v212 = vadd.s32 %v211, %v209
  %v213 = vand.u32 %v212, 255
  %v214 = vsub.s32 255, %v213
  %vm215 = vcmp.eq.s32.totalorder %v92, 2
  %v216 = vsel %vm215, %v214, %v196
  %vm217 = vcmp.eq.s32.totalorder %v92, %v214
  %v218 = vsel %vm217, 2147483648, %v198
  %v219 = vand.u32 %v218, 65535
  %v220 = vshra.s32 %v218, 16
  %v221 = vcvt.s32.f32 %v219
  %v222 = vcvt.s32.f32 %v220
  %223 = vmax.xlane.f32.xlu0 %v222
  %v224 = vpop.xlane.xlu0 %223
  %vm225 = vcmp.eq.f32.partialorder %v222, %v224
  %v226 = vsel %vm225, %v221, -inf
  %227 = vmax.xlane.f32.xlu0 %v226
  %v228 = vpop.xlane.xlu0 %227
  %v229 = vcvt.f32.s32 %v228
  %v230 = vcvt.f32.s32 %v224
  %v231 = vshll.u32 %v230, 16
  %v232 = vadd.s32 %v231, %v229
  %v233 = vand.u32 %v232, 255
  %v234 = vsub.s32 255, %v233
  %vm235 = vcmp.eq.s32.totalorder %v92, 3
  %v236 = vsel %vm235, %v234, %v216
  %vm237 = vcmp.eq.s32.totalorder %v92, %v234
  %v238 = vsel %vm237, 2147483648, %v218
  %v239 = vand.u32 %v238, 65535
  %v240 = vshra.s32 %v238, 16
  %v241 = vcvt.s32.f32 %v239
  %v242 = vcvt.s32.f32 %v240
  %243 = vmax.xlane.f32.xlu0 %v242
  %v244 = vpop.xlane.xlu0 %243
  %vm245 = vcmp.eq.f32.partialorder %v242, %v244
  %v246 = vsel %vm245, %v241, -inf
  %247 = vmax.xlane.f32.xlu0 %v246
  %v248 = vpop.xlane.xlu0 %247
  %v249 = vcvt.f32.s32 %v248
  %v250 = vcvt.f32.s32 %v244
  %v251 = vshll.u32 %v250, 16
  %v252 = vadd.s32 %v251, %v249
  %v253 = vand.u32 %v252, 255
  %v254 = vsub.s32 255, %v253
  %vm255 = vcmp.eq.s32.totalorder %v92, 4
  %v256 = vsel %vm255, %v254, %v236
  %257 = vst [vmem:[%s4] sm:$0xff] %v256
  %v258 = vpack.c.bf16 %v89, %v89
  %v259 = vpack.c.bf16 %v84, %v82
  %v260 = vperm.slane %v18, 2
  %262 = vrot.lane.b32.xlu0 %v258, 96
  %v263 = vpop.permute.xlu0 %262
  %v265 = vsel %vm57, %v263, 0
  %v268 = vsel %vm57, %v259, 0
  %270 = vmatpush.bf16.xpose.msra.mxu0 0
  %271 = vmatpush.bf16.xpose.msra.mxu0 0
  %272 = vmatpush.bf16.xpose.msra.mxu0 0
  %273 = vmatpush.bf16.xpose.msra.mxu0 0
  %274 = vmatpush.bf16.xpose.msra.mxu0 0
  %275 = vmatpush.bf16.xpose.msra.mxu0 0
  %276 = vmatpush.bf16.xpose.msra.mxu0 0
  %277 = vmatpush.bf16.xpose.msra.mxu0 %v268
  %278 = vmatmul.bf16.gmra.mxu0 %v265
  %v279 = vpop.f32.mrf.mxu0
  %v280 = vadd.f32 %v260, %v279
  %v281 = vpop.f32.mrf.mxu0
  %282 = vdwg.mxu0
  %v283 = vsel %vm118, %v280, -inf
  %284 = vmax.xlane.f32.xlu0 %v283
  %v285 = vpop.xlane.xlu0 %284
  %v286 = vsub.f32 %v280, %v285
  %v287 = vmul.f32 %v286, 1.442695
  %v288 = vpow.pop %v287
  %v289 = vpack.c.bf16 %v288, %v288
  %s290 = scalar_lea.vmem %s3, 8
  %v291 = vld [vmem:[%s290] sm:$0xf]
  %v292 = vld [vmem:[%s290 + $0x4] sm:$0xf]
  %v295 = vunpack.c.l.b16 %v291
  %v296 = vunpack.c.l.b16 %v292
  %v297 = vpack.c.b16 %v296, %v295
  %v300 = vsel %vm118, %v289, 0
  %302 = vmatpush.bf16.msra.mxu0 0
  %303 = vmatpush.bf16.msra.mxu0 0
  %304 = vmatpush.bf16.msra.mxu0 0
  %305 = vmatpush.bf16.msra.mxu0 0
  %306 = vmatpush.bf16.msra.mxu0 0
  %307 = vmatpush.bf16.msra.mxu0 0
  %308 = vmatpush.bf16.msra.mxu0 0
  %309 = vmatpush.bf16.msra.mxu0 %v297
  %310 = vmatmul.bf16.gmra.mxu0 %v300
  %v311 = vpop.f32.mrf.mxu0
  %v312 = vadd.f32 0.0, %v311
  %v313 = vpop.f32.mrf.mxu0
  %314 = vdwg.mxu0
  %v316 = vshra.s32 %v312, 31
  %v317 = vand.u32 %v316, 2147483647
  %v318 = vxor.u32 %v312, %v317
  %v319 = vand.u32 %v318, 4294967040
  %v320 = vor.u32 %v319, %v155
  %v321 = vsel %vm157, %v320, 2147483648
  %v322 = vand.u32 %v321, 65535
  %v323 = vshra.s32 %v321, 16
  %v324 = vcvt.s32.f32 %v322
  %v325 = vcvt.s32.f32 %v323
  %326 = vmax.xlane.f32.xlu0 %v325
  %v327 = vpop.xlane.xlu0 %326
  %vm328 = vcmp.eq.f32.partialorder %v325, %v327
  %v329 = vsel %vm328, %v324, -inf
  %330 = vmax.xlane.f32.xlu0 %v329
  %v331 = vpop.xlane.xlu0 %330
  %v332 = vcvt.f32.s32 %v331
  %v333 = vcvt.f32.s32 %v327
  %v334 = vshll.u32 %v333, 16
  %v335 = vadd.s32 %v334, %v332
  %v336 = vand.u32 %v335, 255
  %v337 = vsub.s32 255, %v336
  %v338 = vsel %vm175, %v337, 0
  %vm339 = vcmp.eq.s32.totalorder %v92, %v337
  %v340 = vsel %vm339, 2147483648, %v321
  %v341 = vand.u32 %v340, 65535
  %v342 = vshra.s32 %v340, 16
  %v343 = vcvt.s32.f32 %v341
  %v344 = vcvt.s32.f32 %v342
  %345 = vmax.xlane.f32.xlu0 %v344
  %v346 = vpop.xlane.xlu0 %345
  %vm347 = vcmp.eq.f32.partialorder %v344, %v346
  %v348 = vsel %vm347, %v343, -inf
  %349 = vmax.xlane.f32.xlu0 %v348
  %v350 = vpop.xlane.xlu0 %349
  %v351 = vcvt.f32.s32 %v350
  %v352 = vcvt.f32.s32 %v346
  %v353 = vshll.u32 %v352, 16
  %v354 = vadd.s32 %v353, %v351
  %v355 = vand.u32 %v354, 255
  %v356 = vsub.s32 255, %v355
  %v357 = vsel %vm195, %v356, %v338
  %vm358 = vcmp.eq.s32.totalorder %v92, %v356
  %v359 = vsel %vm358, 2147483648, %v340
  %v360 = vand.u32 %v359, 65535
  %v361 = vshra.s32 %v359, 16
  %v362 = vcvt.s32.f32 %v360
  %v363 = vcvt.s32.f32 %v361
  %364 = vmax.xlane.f32.xlu0 %v363
  %v365 = vpop.xlane.xlu0 %364
  %vm366 = vcmp.eq.f32.partialorder %v363, %v365
  %v367 = vsel %vm366, %v362, -inf
  %368 = vmax.xlane.f32.xlu0 %v367
  %v369 = vpop.xlane.xlu0 %368
  %v370 = vcvt.f32.s32 %v369
  %v371 = vcvt.f32.s32 %v365
  %v372 = vshll.u32 %v371, 16
  %v373 = vadd.s32 %v372, %v370
  %v374 = vand.u32 %v373, 255
  %v375 = vsub.s32 255, %v374
  %v376 = vsel %vm215, %v375, %v357
  %vm377 = vcmp.eq.s32.totalorder %v92, %v375
  %v378 = vsel %vm377, 2147483648, %v359
  %v379 = vand.u32 %v378, 65535
  %v380 = vshra.s32 %v378, 16
  %v381 = vcvt.s32.f32 %v379
  %v382 = vcvt.s32.f32 %v380
  %383 = vmax.xlane.f32.xlu0 %v382
  %v384 = vpop.xlane.xlu0 %383
  %vm385 = vcmp.eq.f32.partialorder %v382, %v384
  %v386 = vsel %vm385, %v381, -inf
  %387 = vmax.xlane.f32.xlu0 %v386
  %v388 = vpop.xlane.xlu0 %387
  %v389 = vcvt.f32.s32 %v388
  %v390 = vcvt.f32.s32 %v384
  %v391 = vshll.u32 %v390, 16
  %v392 = vadd.s32 %v391, %v389
  %v393 = vand.u32 %v392, 255
  %v394 = vsub.s32 255, %v393
  %v395 = vsel %vm235, %v394, %v376
  %vm396 = vcmp.eq.s32.totalorder %v92, %v394
  %v397 = vsel %vm396, 2147483648, %v378
  %v398 = vand.u32 %v397, 65535
  %v399 = vshra.s32 %v397, 16
  %v400 = vcvt.s32.f32 %v398
  %v401 = vcvt.s32.f32 %v399
  %402 = vmax.xlane.f32.xlu0 %v401
  %v403 = vpop.xlane.xlu0 %402
  %vm404 = vcmp.eq.f32.partialorder %v401, %v403
  %v405 = vsel %vm404, %v400, -inf
  %406 = vmax.xlane.f32.xlu0 %v405
  %v407 = vpop.xlane.xlu0 %406
  %v408 = vcvt.f32.s32 %v407
  %v409 = vcvt.f32.s32 %v403
  %v410 = vshll.u32 %v409, 16
  %v411 = vadd.s32 %v410, %v408
  %v412 = vand.u32 %v411, 255
  %v413 = vsub.s32 255, %v412
  %v414 = vsel %vm255, %v413, %v395
  %s415 = scalar_lea.vmem %s4, 8
  %416 = vst [vmem:[%s415] sm:$0xff] %v414
  // Predicated region
  $region18: #{hierent_topk.1} parent=0 // pred_check
    _
  $region19: #{hierent_topk.1} parent=0 // pred_check_branch
    %418 = sbr.rel (0) target = $region21
  $region20: #{hierent_topk.1} parent=0 // pred_region
    _
  $region21: #{hierent_topk.1} parent=0 // pred_fallthru
    _
  // Predicated region
  $region22: #{hierent_topk.1} parent=0 // pred_check
    _
  $region23: #{hierent_topk.1} parent=0 // pred_check_branch
    %420 = sbr.rel (0) target = $region25
  $region24: #{hierent_topk.1} parent=0 // pred_region
    _
  $region25: #{hierent_topk.1} parent=0 // pred_fallthru
    _

</llo_original>
